<compile_context>
chip_gen: v7x
topology: tpu7x:2x2x1
jax: 0.10.0
libtpu: 0.0.40
codegen_flags: <defaults>
</compile_context>

<pallas_src>
import math

import jax
import jax.numpy as jnp
from jax.experimental import pallas as pl
from jax.experimental.pallas import tpu as pltpu


_INV_SQRT2 = 1.0 / math.sqrt(2.0)


def _round_up(x, m):
    return ((x + m - 1) // m) * m


def _erf_gelu_f32(y):
    # Exact erf-based GELU (matches the PyTorch reference), kept in f32.
    return y * 0.5 * (1.0 + jax.lax.erf(y * jnp.float32(_INV_SQRT2)))


def _make_kernel(tn, chunk):
    n_chunks = tn // chunk

    def kernel(x_ref, w_ref, b_ref, o_ref):
        # x_ref: (tm, H); w_ref: (H, tn) [MXU-native K-major];
        # b_ref: (1, tn); o_ref: (tm, tn)
        x = x_ref[...]
        # Chunk the N dim so the erf-GELU (VALU/EUP work) of chunk c overlaps
        # with the matmul (MXU pushes) of chunk c+1.
        for c in range(n_chunks):
            lo = c * chunk
            hi = lo + chunk
            y = jnp.dot(x, w_ref[:, lo:hi], preferred_element_type=jnp.float32)
            y = y + b_ref[:, lo:hi].astype(jnp.float32)
            o_ref[:, lo:hi] = _erf_gelu_f32(y).astype(o_ref.dtype)

    return kernel


def _vmem_capacity_bytes():
    try:
        return int(pltpu.get_tpu_info().vmem_capacity_bytes)
    except Exception:
        return 64 * 1024 * 1024  # conservative: v7x per-TC VMEM


def _pick_tiles(M, H, I, x_isz, w_isz, b_isz, o_isz, budget, tm_pref):
    """Pick (tm, tn, vmem_need). Prefers a full-I-resident weight slab."""
    tm_full = _round_up(M, 16)  # sublane-aligned for both f32 and bf16
    tm_cands = sorted(
        {min(tm_full, t) for t in (tm_pref, 1024, 512, 256, 128, 64, 32, 16)},
        reverse=True,
    )
    I_128 = _round_up(I, 128)
    tn_cands = [I_128] + [t for t in (2048, 1024, 512, 256, 128) if t < I_128]

    def need(tm_, tn_):
        return (2 * tm_ * H * x_isz          # x tile, double-buffered
                + 2 * H * tn_ * w_isz        # weight slab, double-buffered
                + 2 * tn_ * b_isz            # bias tile
                + 2 * tm_ * tn_ * o_isz      # output tile, double-buffered
                + tm_ * tn_ * 4)             # f32 GELU intermediate (epilogue)

    fallback = None
    for tn_ in tn_cands:
        fitting = [t for t in tm_cands if need(t, tn_) <= budget]
        if not fitting:
            continue
        tm_ = fitting[0]
        # Prefer a tile that divides M exactly (skips the jnp.pad copy of x),
        # as long as it is at least half the largest fitting tile.
        for t in fitting:
            if 2 * t >= tm_ and M % t == 0:
                tm_ = t
                break
        if tm_ >= min(256, tm_full):
            return tm_, tn_, need(tm_, tn_)
        if fallback is None:
            fallback = (tm_, tn_, need(tm_, tn_))
    if fallback is not None:
        return fallback
    tm_, tn_ = tm_cands[-1], 128
    return tm_, tn_, need(tm_, tn_)


def bert_intermediate(hidden_states, weight, bias, *, tm=512):
    """BertIntermediate forward: erf-GELU(hidden_states @ weight.T + bias).

    hidden_states: [B, S, H]
    weight:        [I, H]  (PyTorch nn.Linear layout)
    bias:          [I]
    returns:       [B, S, I]
    """
    B, S, H = hidden_states.shape
    I = weight.shape[0]
    M = B * S

    x_dtype = hidden_states.dtype
    x_isz = jnp.dtype(x_dtype).itemsize
    # Use the activation dtype on the MXU (no-op when dtypes already match;
    # on v5e pass bf16 activations so both operands hit the bf16 MXU path).
    w_dtype = x_dtype
    w_isz = jnp.dtype(w_dtype).itemsize
    b_isz = 4  # bias consumed in f32
    o_isz = x_isz

    vmem_cap = _vmem_capacity_bytes()
    budget = int(0.75 * vmem_cap)
    tm_pref = _round_up(max(int(tm), 16), 16)
    tm_eff, tn_eff, vmem_need = _pick_tiles(
        M, H, I, x_isz, w_isz, b_isz, o_isz, budget, tm_pref)

    M_pad = _round_up(M, tm_eff)
    I_pad = _round_up(I, tn_eff)

    x2d = hidden_states.reshape(M, H)
    if M_pad != M:
        x2d = jnp.pad(x2d, ((0, M_pad - M), (0, 0)))

    # Pre-transpose the weight to MXU-native [K, N] = [H, I] in the wrapper
    # (single HBM pass) so the kernel never transposes the resident slab.
    # TODO(synk): in a real model store the parameter pre-transposed so this
    # happens once at parameter-prep time instead of per call.
    wt = weight.astype(w_dtype).T                       # [H, I]
    b = bias.astype(jnp.float32)
    if I_pad != I:
        wt = jnp.pad(wt, ((0, 0), (0, I_pad - I)))
        b = jnp.pad(b, ((0, I_pad - I),))
    b2d = b.reshape(1, I_pad)

    # Weight/N axis OUTER so each slab stays VMEM-resident across the inner M
    # loop; when tn_eff == I_pad this axis has size 1 and x is read once.
    grid = (I_pad // tn_eff, M_pad // tm_eff)

    # Epilogue chunking (<=512 lanes per chunk, multiple of 128).
    if tn_eff <= 512:
        chunk = tn_eff
    else:
        chunk = next(c for c in (512, 256, 128) if tn_eff % c == 0)

    n_weight_passes = I_pad // tn_eff
    cost = pl.CostEstimate(
        flops=2 * M_pad * H * I_pad,
        transcendentals=M_pad * I_pad,                  # one erf per output elem
        bytes_accessed=(
            n_weight_passes * M_pad * H * x_isz         # x re-streamed per slab
            + I_pad * H * w_isz
            + I_pad * b_isz
            + M_pad * I_pad * o_isz
        ),
    )

    vmem_limit = int(min(int(0.9 * vmem_cap),
                         max(vmem_need + (4 << 20), 32 * 1024 * 1024)))

    out = pl.pallas_call(
        _make_kernel(tn_eff, chunk),
        out_shape=jax.ShapeDtypeStruct((M_pad, I_pad), x_dtype),
        grid_spec=pltpu.PrefetchScalarGridSpec(
            num_scalar_prefetch=0,
            grid=grid,
            in_specs=[
                pl.BlockSpec((tm_eff, H), lambda j, i: (i, 0)),   # activations
                pl.BlockSpec((H, tn_eff), lambda j, i: (0, j)),   # weight [H, I] slab
                pl.BlockSpec((1, tn_eff), lambda j, i: (0, j)),   # bias
            ],
            out_specs=pl.BlockSpec((tm_eff, tn_eff), lambda j, i: (i, j)),
        ),
        compiler_params=pltpu.CompilerParams(
            dimension_semantics=("parallel", "parallel"),
            vmem_limit_bytes=vmem_limit,
        ),
        cost_estimate=cost,
    )(x2d, wt, b2d)

    return out[:M, :I].reshape(B, S, I)


def _gelu_ref(x):
    return x * 0.5 * (1.0 + jax.lax.erf(x / jnp.sqrt(2.0)))


if __name__ == "__main__":
    # Small, module-consistent shapes: batch=2, seq=8, hidden=32, intermediate=128
    B, S, H, I = 2, 8, 32, 128

    key = jax.random.PRNGKey(0)
    kx, kw, kb = jax.random.split(key, 3)
    x = jax.random.normal(kx, (B, S, H), dtype=jnp.float32)
    # Deterministic synthetic parameters (PyTorch Linear shapes: W [I, H], b [I])
    weight = jax.random.normal(kw, (I, H), dtype=jnp.float32) * 0.02
    bias = jax.random.normal(kb, (I,), dtype=jnp.float32) * 0.02

    out = bert_intermediate(x, weight, bias)
    out = jax.block_until_ready(out)

    # Pure-JAX reference check
    ref = _gelu_ref(jnp.einsum("bsh,ih->bsi", x, weight) + bias)
    assert out.shape == (B, S, I)
    assert jnp.allclose(out, ref, atol=1e-5, rtol=1e-5), "mismatch vs reference"

    print("KERNEL_OK")
</pallas_src>

<mosaic_0001>
module attributes {stable_mosaic.version = 11 : i64} {
  func.func @kernel(%arg0: i32, %arg1: i32, %arg2: memref<16x32xf32, #tpu.memory_space<vmem>>, %arg3: memref<32x128xf32, #tpu.memory_space<vmem>>, %arg4: memref<1x128xf32, #tpu.memory_space<vmem>>, %arg5: memref<16x128xf32, #tpu.memory_space<vmem>>) attributes {dimension_semantics = [#tpu.dimension_semantics<parallel>, #tpu.dimension_semantics<parallel>], iteration_bounds = array<i64: 1, 1>, scalar_prefetch = 0 : i64, scratch_operands = 0 : i64, tpu.core_type = #tpu.core_type<tc>, window_params = [{transform_indices = @transform_0, window_bounds = array<i64: 16, 32>}, {transform_indices = @transform_1, window_bounds = array<i64: 32, 128>}, {transform_indices = @transform_2, window_bounds = array<i64: 1, 128>}, {transform_indices = @transform_3, window_bounds = array<i64: 16, 128>}]} {
    %c0 = arith.constant 0 : index
    %c0_0 = arith.constant 0 : index
    %0 = vector.load %arg2[%c0, %c0_0] : memref<16x32xf32, #tpu.memory_space<vmem>>, vector<16x32xf32>
    %c0_1 = arith.constant 0 : index
    %c0_2 = arith.constant 0 : index
    %1 = vector.load %arg3[%c0_1, %c0_2] : memref<32x128xf32, #tpu.memory_space<vmem>>, vector<32x128xf32>
    %cst = arith.constant dense<0.000000e+00> : vector<16x128xf32>
    %2 = tpu.matmul %0, %1, %cst {dimension_numbers = #tpu.dot_dimension_numbers<[1], [0], [0], [1], [0, 0, 1, 1], [], []>} : vector<16x32xf32>, vector<32x128xf32>, vector<16x128xf32> -> vector<16x128xf32>
    %c0_3 = arith.constant 0 : index
    %c0_4 = arith.constant 0 : index
    %3 = vector.load %arg4[%c0_3, %c0_4] : memref<1x128xf32, #tpu.memory_space<vmem>>, vector<1x128xf32>
    %4 = vector.broadcast %3 : vector<1x128xf32> to vector<16x128xf32>
    %5 = arith.addf %2, %4 : vector<16x128xf32>
    %cst_5 = arith.constant 5.000000e-01 : f32
    %6 = vector.broadcast %cst_5 : f32 to vector<16x128xf32>
    %7 = arith.mulf %5, %6 : vector<16x128xf32>
    %cst_6 = arith.constant 0.707106769 : f32
    %8 = vector.broadcast %cst_6 : f32 to vector<16x128xf32>
    %9 = arith.mulf %5, %8 : vector<16x128xf32>
    %10 = math.erf %9 : vector<16x128xf32>
    %cst_7 = arith.constant 1.000000e+00 : f32
    %11 = vector.broadcast %cst_7 : f32 to vector<16x128xf32>
    %12 = arith.addf %11, %10 : vector<16x128xf32>
    %13 = arith.mulf %7, %12 : vector<16x128xf32>
    %c0_8 = arith.constant 0 : index
    %c0_9 = arith.constant 0 : index
    %14 = vector.load %arg5[%c0_8, %c0_9] : memref<16x128xf32, #tpu.memory_space<vmem>>, vector<16x128xf32>
    tpu.vector_store %arg5[%c0_8, %c0_9], %13 {strides = array<i32>} : memref<16x128xf32, #tpu.memory_space<vmem>>, vector<16x128xf32>,
    return
  }
  func.func @transform_0(%arg0: i32, %arg1: i32) -> (i32, i32) {
    %c0_i32 = arith.constant 0 : i32
    %c0_i32_0 = arith.constant 0 : i32
    return %arg1, %c0_i32 : i32, i32
  }
  func.func @transform_1(%arg0: i32, %arg1: i32) -> (i32, i32) {
    %c0_i32 = arith.constant 0 : i32
    %c0_i32_0 = arith.constant 0 : i32
    return %c0_i32, %arg0 : i32, i32
  }
  func.func @transform_2(%arg0: i32, %arg1: i32) -> (i32, i32) {
    %c0_i32 = arith.constant 0 : i32
    %c0_i32_0 = arith.constant 0 : i32
    return %c0_i32, %arg0 : i32, i32
  }
  func.func @transform_3(%arg0: i32, %arg1: i32) -> (i32, i32) {
    %c0_i32 = arith.constant 0 : i32
    return %arg1, %arg0 : i32, i32
  }
}

</mosaic_0001>

<llo_original>
// kernel: tpu_custom_call.1
$region0: #{tpu_custom_call.1}
  #allocation0 [shape = 'u32[]', space=smem, size = 0x4, offset = 0x4, fixed_abs, tag = 'smem constant byte address 0x4 - core index']
  #allocation1 [shape = 'u32[144,128]{1,0:T(1,128)}', space=vmem, size = 0x12000, scoped, tag = 'internal scratch']
  %s0 = inlined_call_operand.hbm [shape: f32[16,32], index: 0, kind: input, shape index: {}]
  %s1 = inlined_call_operand.hbm [shape: f32[32,128], index: 1, kind: input, shape index: {}]
  %s2 = inlined_call_operand.vmem [shape: f32[1,128], index: 2, kind: input, shape index: {}]
  %s3 = inlined_call_operand.hbm [shape: f32[16,128], index: 3, kind: output, shape index: {}]
  %s4 = sld [smem:[#allocation0]]
  $region30: #{tpu_custom_call.1} parent=0
    _
  %s6 = ssub.s32 1, %s4
  %s7 = scalar_select 0, %s6, %s4
  $region1: #{tpu_custom_call.1} parent=0
    #allocation2 [shape = 'u8[8192]{0}', space=vmem, size = 0x2000, scoped, tag = 'input window, operand 0, single buffered']
    #allocation3 [shape = 's32[1]{0}', space=sflag, size = 0x4, scoped, tag = 'scoped memory for tpu_custom_call.1']
    #allocation4 [shape = 's32[1]{0}', space=sflag, size = 0x4, scoped, tag = 'scoped memory for tpu_custom_call.1']
    #allocation5 [shape = 'u8[16384]{0}', space=vmem, size = 0x4000, scoped, tag = 'input window, operand 1, single buffered']
    #allocation6 [shape = 's32[1]{0}', space=sflag, size = 0x4, scoped, tag = 'scoped memory for tpu_custom_call.1']
    #allocation7 [shape = 'u8[8192]{0}', space=vmem, size = 0x2000, scoped, tag = 'output window, operand 0, single buffered']
    %8 = vsyncpa [#allocation3], 0
    %9 = vsyncpa [#allocation6], 0
    %10 = vsyncpa [#allocation4], 0
    // Predicated region
    $region2: #{tpu_custom_call.1} parent=1 // pred_check
      _
    $region3: #{tpu_custom_call.1} parent=1 // pred_check_branch
      %12 = sbr.rel (0) target = $region5
    $region4: #{tpu_custom_call.1} parent=1 // pred_region
      %s14 = ssub.s32 256, 256
      %15 = vsyncadd [#allocation3], %s14
      %s16 = sshll.u32 [#allocation2], 4
      %s17 = int_to_ptr.vmem [resolvable:$true] %s16
      %22 = dma.hbm_to_vmem [thread:$0]  %s0, 256, %s17, [#allocation3], 128, 128, 8
    $region5: #{tpu_custom_call.1} parent=1 // pred_fallthru
      _
    // Predicated region
    $region6: #{tpu_custom_call.1} parent=1 // pred_check
      _
    $region7: #{tpu_custom_call.1} parent=1 // pred_check_branch
      %24 = sbr.rel (0) target = $region9
    $region8: #{tpu_custom_call.1} parent=1 // pred_region
      %s26 = ssub.s32 512, 512
      %27 = vsyncadd [#allocation6], %s26
      %s28 = sshll.u32 [#allocation5], 4
      %s29 = int_to_ptr.vmem [resolvable:$true] %s28
      %34 = dma.hbm_to_vmem [thread:$0]  %s1, 512, %s29, [#allocation6], 128, 128, 8
    $region9: #{tpu_custom_call.1} parent=1 // pred_fallthru
      _
    // Predicated region
    $region10: #{tpu_custom_call.1} parent=1 // pred_check
      _
    $region11: #{tpu_custom_call.1} parent=1 // pred_check_branch
      %36 = sbr.rel (0) target = $region13
    $region12: #{tpu_custom_call.1} parent=1 // pred_region
      _
    $region13: #{tpu_custom_call.1} parent=1 // pred_fallthru
      _
    // Predicated region
    $region14: #{tpu_custom_call.1} parent=1 // pred_check
      _
    $region15: #{tpu_custom_call.1} parent=1 // pred_check_branch
      %38 = sbr.rel (0) target = $region17
    $region16: #{tpu_custom_call.1} parent=1 // pred_region
      %39 = dma.done [#allocation3], 256
    $region17: #{tpu_custom_call.1} parent=1 // pred_fallthru
      _
    // Predicated region
    $region18: #{tpu_custom_call.1} parent=1 // pred_check
      _
    $region19: #{tpu_custom_call.1} parent=1 // pred_check_branch
      %41 = sbr.rel (0) target = $region21
    $region20: #{tpu_custom_call.1} parent=1 // pred_region
      %42 = dma.done [#allocation6], 512
    $region21: #{tpu_custom_call.1} parent=1 // pred_fallthru
      _
    %v43 = vld [vmem:[#allocation2] sm:$0xff]
    %v44 = vld [vmem:[#allocation2 + $0x8] sm:$0xff]
    %v45 = vld [vmem:[#allocation5] sm:$0xff]
    %v46 = vld [vmem:[#allocation5 + $0x8] sm:$0xff]
    %v47 = vld [vmem:[#allocation5 + $0x10] sm:$0xff]
    %v48 = vld [vmem:[#allocation5 + $0x18] sm:$0xff]
    %v49 = vld [vmem:[%s2] sm:$0x1]
    %v51 = vlaneseq
    %v52 = vshrl.u32 %v51, 7
    %v53 = vsub.s32 0, %v52
    %v54 = vrot.slane %v49, %v53
    %vm56 = vcmask 261120
    %v58 = vsel %vm56, %v43, 0
    %v61 = vsel %vm56, %v44, 0
    %63 = vmatprep.subr.mxu0 0.0
    %64 = vmatpush1.msra.mxu0 %v45
    %65 = vmatprep.subr.mxu0 0.0
    %66 = vmatpush1.msra.mxu0 %v46
    %67 = vmatprep.subr.mxu0 0.0
    %68 = vmatpush1.msra.mxu0 %v47
    %69 = vmatprep.subr.mxu0 0.0
    %70 = vmatpush1.msra.mxu0 %v48
    %71 = vmatprep.subr.mxu0 0.0
    %72 = vmatpush1.msra.mxu0 0.0
    %73 = vmatprep.subr.mxu0 0.0
    %74 = vmatpush1.msra.mxu0 0.0
    %75 = vmatprep.subr.mxu0 0.0
    %76 = vmatpush1.msra.mxu0 0.0
    %77 = vmatprep.subr.mxu0 0.0
    %78 = vmatpush1.msra.mxu0 0.0
    %79 = vmatprep.subr.mxu0 0.0
    %80 = vmatpush1.msra.mxu0 0.0
    %81 = vmatprep.subr.mxu0 0.0
    %82 = vmatpush1.msra.mxu0 0.0
    %83 = vmatprep.subr.mxu0 0.0
    %84 = vmatpush1.msra.mxu0 0.0
    %85 = vmatprep.subr.mxu0 0.0
    %86 = vmatpush1.msra.mxu0 0.0
    %87 = vmatprep.subr.mxu0 0.0
    %88 = vmatpush1.msra.mxu0 0.0
    %89 = vmatprep.subr.mxu0 0.0
    %90 = vmatpush1.msra.mxu0 0.0
    %91 = vmatprep.subr.mxu0 0.0
    %92 = vmatpush1.msra.mxu0 0.0
    %93 = vmatprep.subr.mxu0 0.0
    %94 = vmatpush1.msra.mxu0 0.0
    %95 = vmatprep.subr.mxu0 0.0
    %96 = vmatpush1.msra.mxu0 0.0
    %97 = vmatprep.subr.mxu0 0.0
    %98 = vmatpush1.msra.mxu0 0.0
    %99 = vmatprep.subr.mxu0 0.0
    %100 = vmatpush1.msra.mxu0 0.0
    %101 = vmatprep.subr.mxu0 0.0
    %102 = vmatpush1.msra.mxu0 0.0
    %103 = vmatprep.subr.mxu0 0.0
    %104 = vmatpush1.msra.mxu0 0.0
    %105 = vmatprep.subr.mxu0 0.0
    %106 = vmatpush1.msra.mxu0 0.0
    %107 = vmatprep.subr.mxu0 0.0
    %108 = vmatpush1.msra.mxu0 0.0
    %109 = vmatprep.subr.mxu0 0.0
    %110 = vmatpush1.msra.mxu0 0.0
    %111 = vmatprep.subr.mxu0 0.0
    %112 = vmatpush1.msra.mxu0 0.0
    %113 = vmatprep.subr.mxu0 0.0
    %114 = vmatpush1.msra.mxu0 0.0
    %115 = vmatprep.subr.mxu0 0.0
    %116 = vmatpush1.msra.mxu0 0.0
    %117 = vmatprep.subr.mxu0 0.0
    %118 = vmatpush1.msra.mxu0 0.0
    %119 = vmatprep.subr.mxu0 0.0
    %120 = vmatpush1.msra.mxu0 0.0
    %121 = vmatprep.subr.mxu0 0.0
    %122 = vmatpush1.msra.mxu0 0.0
    %123 = vmatprep.subr.mxu0 0.0
    %124 = vmatpush1.msra.mxu0 0.0
    %125 = vmatprep.subr.mxu0 0.0
    %126 = vmatpush1.msra.mxu0 0.0
    %127 = vmatprep.mubr.f32.mxu0 0.0
    %128 = vmatmul.mubr.f32.gmra.mrb[0].mxu0 %v58
    %v129 = vpop.f32.mrb[0].mxu0
    %v130 = vadd.f32 %v54, %v129
    %v131 = vpop.f32.mrb[0].mxu0
    %132 = vmatprep.mubr.f32.mxu0 0.0
    %133 = vmatmul.mubr.f32.gmra.mrb[0].mxu0 %v61
    %v134 = vpop.f32.mrb[0].mxu0
    %v135 = vadd.f32 %v54, %v134
    %v136 = vpop.f32.mrb[0].mxu0
    %137 = vdwg.mxu0
    %v138 = vmul.f32 %v130, 0.5
    %v139 = vmul.f32 %v135, 0.5
    %v140 = vmul.f32 %v130, 0.70710677
    %v141 = vmul.f32 %v135, 0.70710677
    %v142 = verf.f32.pop %v140
    %v143 = verf.f32.pop %v141
    %v144 = vadd.f32 %v142, 1.0
    %v145 = vadd.f32 %v143, 1.0
    %v146 = vmul.f32 %v138, %v144
    %v147 = vmul.f32 %v139, %v145
    %148 = vst [vmem:[#allocation7] sm:$0xff] %v146
    %149 = vst [vmem:[#allocation7 + $0x8] sm:$0xff] %v147
    // Predicated region
    $region22: #{tpu_custom_call.1} parent=1 // pred_check
      _
    $region23: #{tpu_custom_call.1} parent=1 // pred_check_branch
      %151 = sbr.rel (0) target = $region25
    $region24: #{tpu_custom_call.1} parent=1 // pred_region
      %s153 = ssub.s32 256, 256
      %154 = vsyncadd [#allocation4], %s153
      %s155 = sshll.u32 [#allocation7], 4
      %s156 = int_to_ptr.vmem [resolvable:$true] %s155
      %161 = dma.vmem_to_hbm [thread:$0]  %s156, 256, %s3, [#allocation4], 128, 128, 8
    $region25: #{tpu_custom_call.1} parent=1 // pred_fallthru
      _
    // Predicated region
    $region26: #{tpu_custom_call.1} parent=1 // pred_check
      _
    $region27: #{tpu_custom_call.1} parent=1 // pred_check_branch
      %163 = sbr.rel (0) target = $region29
    $region28: #{tpu_custom_call.1} parent=1 // pred_region
      %164 = dma.done [#allocation4], 256
    $region29: #{tpu_custom_call.1} parent=1 // pred_fallthru
      _
    %165 = vsyncpa [#allocation3], 1
    %166 = vsyncpa [#allocation6], 1
    %167 = vsyncpa [#allocation4], 1

</llo_original>
